<compile_context>
chip_gen: v7x
topology: tpu7x:2x2x1
jax: 0.10.0
libtpu: 0.0.40
codegen_flags: <defaults>
</compile_context>

<pallas_src>
import jax
import jax.numpy as jnp
from jax.experimental import pallas as pl
from jax.experimental.pallas import tpu as pltpu


def _round_up(x, m):
    return ((x + m - 1) // m) * m


def _classifier2_kernel(x_ref, w2_ref, b2_ref, w3_ref, b3_ref, out_ref):
    # linear2: [tm, D] @ [D, H] + b2
    h = jnp.dot(x_ref[...], w2_ref[...], preferred_element_type=jnp.float32)
    h = h + b2_ref[...]
    # linear3: [tm, H] @ [H, O] + b3  (fused; intermediate stays in vregs/VMEM)
    o = jnp.dot(h, w3_ref[...], preferred_element_type=jnp.float32)
    out_ref[...] = o + b3_ref[...]


def _classifier1_kernel(x_ref, w2_ref, b2_ref, out_ref):
    o = jnp.dot(x_ref[...], w2_ref[...], preferred_element_type=jnp.float32)
    out_ref[...] = o + b2_ref[...]


def _pad2(a, rows, cols):
    return jnp.pad(a, ((0, rows - a.shape[0]), (0, cols - a.shape[1])))


def classifier_forward(x, params):
    """Wrapper: pad to lane/sublane-dense shapes, run one fused pallas_call,
    slice the result back to the logical shape."""
    n_layers = params["n_layers"]
    B, D = x.shape
    in_shape = params["w2"].shape[0]
    assert D == in_shape, f"expected x with {in_shape} features, got {D}"

    D_pad = _round_up(in_shape, 128)

    # Batch tiling: one big tile for small B, 256-row tiles for large B.
    tm = 256 if B >= 256 else _round_up(B, 8)
    B_pad = _round_up(B, tm)
    grid = (B_pad // tm,)

    x_p = _pad2(x.astype(jnp.float32), B_pad, D_pad)

    x_spec = pl.BlockSpec((tm, D_pad), lambda i: (i, 0))
    full = lambda a: pl.BlockSpec(a.shape, lambda i: (0, 0))
    cparams = pltpu.CompilerParams(dimension_semantics=("parallel",))

    if n_layers == 2:
        hid = params["w2"].shape[1]
        out_features = params["w3"].shape[1]
        H_pad = _round_up(hid, 128)
        O_pad = _round_up(out_features, 128)

        w2_p = _pad2(params["w2"], D_pad, H_pad)
        b2_p = _pad2(params["b2"], 1, H_pad)
        w3_p = _pad2(params["w3"], H_pad, O_pad)
        b3_p = _pad2(params["b3"], 1, O_pad)

        out_p = pl.pallas_call(
            _classifier2_kernel,
            grid=grid,
            in_specs=[x_spec, full(w2_p), full(b2_p), full(w3_p), full(b3_p)],
            out_specs=pl.BlockSpec((tm, O_pad), lambda i: (i, 0)),
            out_shape=jax.ShapeDtypeStruct((B_pad, O_pad), jnp.float32),
            compiler_params=cparams,
        )(x_p, w2_p, b2_p, w3_p, b3_p)
    else:
        out_features = params["w2"].shape[1]
        O_pad = _round_up(out_features, 128)

        w2_p = _pad2(params["w2"], D_pad, O_pad)
        b2_p = _pad2(params["b2"], 1, O_pad)

        out_p = pl.pallas_call(
            _classifier1_kernel,
            grid=grid,
            in_specs=[x_spec, full(w2_p), full(b2_p)],
            out_specs=pl.BlockSpec((tm, O_pad), lambda i: (i, 0)),
            out_shape=jax.ShapeDtypeStruct((B_pad, O_pad), jnp.float32),
            compiler_params=cparams,
        )(x_p, w2_p, b2_p)

    return out_p[:B, :out_features]


def init_classifier_params(key, in_shape=64, out_shape=9, n_layers=2):
    """Matches Classifier.random_init: kaiming_uniform_ weights (a=0, fan_in =
    in_features), zero biases. Weights stored pre-transposed [in, out]."""
    k2, k3 = jax.random.split(key)

    def kaiming_uniform(k, fan_in, fan_out):
        bound = (6.0 / fan_in) ** 0.5
        return jax.random.uniform(k, (fan_in, fan_out), jnp.float32, -bound, bound)

    if n_layers == 2:
        return {
            "n_layers": 2,
            "w2": kaiming_uniform(k2, in_shape, in_shape),
            "b2": jnp.zeros((1, in_shape), jnp.float32),
            "w3": kaiming_uniform(k3, in_shape, out_shape),
            "b3": jnp.zeros((1, out_shape), jnp.float32),
        }
    return {
        "n_layers": 1,
        "w2": kaiming_uniform(k2, in_shape, out_shape),
        "b2": jnp.zeros((1, out_shape), jnp.float32),
    }


if __name__ == "__main__":
    # Small shapes consistent with the module defaults.
    in_shape, out_shape, n_layers = 64, 9, 2
    B = 16

    key = jax.random.PRNGKey(0)
    k_params, k_x = jax.random.split(key)

    params = init_classifier_params(k_params, in_shape, out_shape, n_layers)
    x = jax.random.normal(k_x, (B, in_shape), jnp.float32)

    out = classifier_forward(x, params)
    jax.block_until_ready(out)

    # Pure-JAX reference (same math as the PyTorch forward).
    ref = x @ params["w2"] + params["b2"]
    if n_layers == 2:
        ref = ref @ params["w3"] + params["b3"]

    assert out.shape == (B, out_shape), out.shape
    assert jnp.allclose(out, ref, atol=1e-4, rtol=1e-4), "mismatch vs reference"

    # TODO(synk): predict / predict_proba (.detach().cpu().numpy(), argmax on host)
    # are host-side conveniences, not part of the kernel.
    print("KERNEL_OK")
</pallas_src>

<mosaic_0001>
module attributes {stable_mosaic.version = 11 : i64} {
  func.func @_classifier2_kernel(%arg0: i32, %arg1: memref<16x128xf32, #tpu.memory_space<vmem>>, %arg2: memref<128x128xf32, #tpu.memory_space<vmem>>, %arg3: memref<1x128xf32, #tpu.memory_space<vmem>>, %arg4: memref<128x128xf32, #tpu.memory_space<vmem>>, %arg5: memref<1x128xf32, #tpu.memory_space<vmem>>, %arg6: memref<16x128xf32, #tpu.memory_space<vmem>>) attributes {dimension_semantics = [#tpu.dimension_semantics<parallel>], iteration_bounds = array<i64: 1>, scalar_prefetch = 0 : i64, scratch_operands = 0 : i64, tpu.core_type = #tpu.core_type<tc>, window_params = [{transform_indices = @transform_0, window_bounds = array<i64: 16, 128>}, {pipeline_mode = #tpu.pipeline_mode<synchronous>, transform_indices = @transform_1, window_bounds = array<i64: 128, 128>}, {pipeline_mode = #tpu.pipeline_mode<synchronous>, transform_indices = @transform_2, window_bounds = array<i64: 1, 128>}, {pipeline_mode = #tpu.pipeline_mode<synchronous>, transform_indices = @transform_3, window_bounds = array<i64: 128, 128>}, {pipeline_mode = #tpu.pipeline_mode<synchronous>, transform_indices = @transform_4, window_bounds = array<i64: 1, 128>}, {transform_indices = @transform_5, window_bounds = array<i64: 16, 128>}]} {
    %c0 = arith.constant 0 : index
    %c0_0 = arith.constant 0 : index
    %0 = vector.load %arg1[%c0, %c0_0] : memref<16x128xf32, #tpu.memory_space<vmem>>, vector<16x128xf32>
    %c0_1 = arith.constant 0 : index
    %c0_2 = arith.constant 0 : index
    %1 = vector.load %arg2[%c0_1, %c0_2] : memref<128x128xf32, #tpu.memory_space<vmem>>, vector<128x128xf32>
    %cst = arith.constant dense<0.000000e+00> : vector<16x128xf32>
    %2 = tpu.matmul %0, %1, %cst {dimension_numbers = #tpu.dot_dimension_numbers<[1], [0], [0], [1], [0, 0, 1, 1], [], []>} : vector<16x128xf32>, vector<128x128xf32>, vector<16x128xf32> -> vector<16x128xf32>
    %c0_3 = arith.constant 0 : index
    %c0_4 = arith.constant 0 : index
    %3 = vector.load %arg3[%c0_3, %c0_4] : memref<1x128xf32, #tpu.memory_space<vmem>>, vector<1x128xf32>
    %4 = vector.broadcast %3 : vector<1x128xf32> to vector<16x128xf32>
    %5 = arith.addf %2, %4 : vector<16x128xf32>
    %c0_5 = arith.constant 0 : index
    %c0_6 = arith.constant 0 : index
    %6 = vector.load %arg4[%c0_5, %c0_6] : memref<128x128xf32, #tpu.memory_space<vmem>>, vector<128x128xf32>
    %cst_7 = arith.constant dense<0.000000e+00> : vector<16x128xf32>
    %7 = tpu.matmul %5, %6, %cst_7 {dimension_numbers = #tpu.dot_dimension_numbers<[1], [0], [0], [1], [0, 0, 1, 1], [], []>} : vector<16x128xf32>, vector<128x128xf32>, vector<16x128xf32> -> vector<16x128xf32>
    %c0_8 = arith.constant 0 : index
    %c0_9 = arith.constant 0 : index
    %8 = vector.load %arg5[%c0_8, %c0_9] : memref<1x128xf32, #tpu.memory_space<vmem>>, vector<1x128xf32>
    %9 = vector.broadcast %8 : vector<1x128xf32> to vector<16x128xf32>
    %10 = arith.addf %7, %9 : vector<16x128xf32>
    %c0_10 = arith.constant 0 : index
    %c0_11 = arith.constant 0 : index
    %11 = vector.load %arg6[%c0_10, %c0_11] : memref<16x128xf32, #tpu.memory_space<vmem>>, vector<16x128xf32>
    tpu.vector_store %arg6[%c0_10, %c0_11], %10 {strides = array<i32>} : memref<16x128xf32, #tpu.memory_space<vmem>>, vector<16x128xf32>,
    return
  }
  func.func @transform_0(%arg0: i32) -> (i32, i32) {
    %c0_i32 = arith.constant 0 : i32
    %c0_i32_0 = arith.constant 0 : i32
    return %arg0, %c0_i32 : i32, i32
  }
  func.func @transform_1(%arg0: i32) -> (i32, i32) {
    %c0_i32 = arith.constant 0 : i32
    %c0_i32_0 = arith.constant 0 : i32
    %c0_i32_1 = arith.constant 0 : i32
    return %c0_i32, %c0_i32_0 : i32, i32
  }
  func.func @transform_2(%arg0: i32) -> (i32, i32) {
    %c0_i32 = arith.constant 0 : i32
    %c0_i32_0 = arith.constant 0 : i32
    %c0_i32_1 = arith.constant 0 : i32
    return %c0_i32, %c0_i32_0 : i32, i32
  }
  func.func @transform_3(%arg0: i32) -> (i32, i32) {
    %c0_i32 = arith.constant 0 : i32
    %c0_i32_0 = arith.constant 0 : i32
    %c0_i32_1 = arith.constant 0 : i32
    return %c0_i32, %c0_i32_0 : i32, i32
  }
  func.func @transform_4(%arg0: i32) -> (i32, i32) {
    %c0_i32 = arith.constant 0 : i32
    %c0_i32_0 = arith.constant 0 : i32
    %c0_i32_1 = arith.constant 0 : i32
    return %c0_i32, %c0_i32_0 : i32, i32
  }
  func.func @transform_5(%arg0: i32) -> (i32, i32) {
    %c0_i32 = arith.constant 0 : i32
    %c0_i32_0 = arith.constant 0 : i32
    return %arg0, %c0_i32 : i32, i32
  }
}

</mosaic_0001>

<llo_original>
// kernel: tpu_custom_call.1
$region0: #{tpu_custom_call.1}
  #allocation0 [shape = 'u32[]', space=smem, size = 0x4, offset = 0x4, fixed_abs, tag = 'smem constant byte address 0x4 - core index']
  #allocation1 [shape = 'u32[144,128]{1,0:T(1,128)}', space=vmem, size = 0x12000, scoped, tag = 'internal scratch']
  %s0 = inlined_call_operand.hbm [shape: f32[16,128], index: 0, kind: input, shape index: {}]
  %s1 = inlined_call_operand.hbm [shape: f32[128,128], index: 1, kind: input, shape index: {}]
  %s2 = inlined_call_operand.vmem [shape: f32[1,128], index: 2, kind: input, shape index: {}]
  %s3 = inlined_call_operand.hbm [shape: f32[128,128], index: 3, kind: input, shape index: {}]
  %s4 = inlined_call_operand.vmem [shape: f32[1,128], index: 4, kind: input, shape index: {}]
  %s5 = inlined_call_operand.hbm [shape: f32[16,128], index: 5, kind: output, shape index: {}]
  %s6 = sld [smem:[#allocation0]]
  $region42: #{tpu_custom_call.1} parent=0
    _
  %s8 = ssub.s32 1, %s6
  %s9 = scalar_select 0, %s8, %s6
  $region1: #{tpu_custom_call.1} parent=0
    #allocation2 [shape = 'u8[8192]{0}', space=vmem, size = 0x2000, scoped, tag = 'input window, operand 0, single buffered']
    #allocation3 [shape = 's32[1]{0}', space=sflag, size = 0x4, scoped, tag = 'scoped memory for tpu_custom_call.1']
    #allocation4 [shape = 's32[1]{0}', space=sflag, size = 0x4, scoped, tag = 'scoped memory for tpu_custom_call.1']
    #allocation5 [shape = 'u8[65536]{0}', space=vmem, size = 0x10000, scoped, tag = 'input window, operand 1, single buffered']
    #allocation6 [shape = 's32[1]{0}', space=sflag, size = 0x4, scoped, tag = 'scoped memory for tpu_custom_call.1']
    #allocation7 [shape = 'u8[65536]{0}', space=vmem, size = 0x10000, scoped, tag = 'input window, operand 3, single buffered']
    #allocation8 [shape = 'u8[8192]{0}', space=vmem, size = 0x2000, scoped, tag = 'output window, operand 0, single buffered']
    %10 = vsyncpa [#allocation3], 0
    %11 = vsyncpa [#allocation6], 0
    %12 = vsyncpa [#allocation4], 0
    // Predicated region
    $region2: #{tpu_custom_call.1} parent=1 // pred_check
      _
    $region3: #{tpu_custom_call.1} parent=1 // pred_check_branch
      %14 = sbr.rel (0) target = $region5
    $region4: #{tpu_custom_call.1} parent=1 // pred_region
      %s16 = ssub.s32 256, 256
      %17 = vsyncadd [#allocation3], %s16
      %s18 = sshll.u32 [#allocation2], 4
      %s19 = int_to_ptr.vmem [resolvable:$true] %s18
      %24 = dma.hbm_to_vmem [thread:$0]  %s0, 256, %s19, [#allocation3], 128, 128, 8
    $region5: #{tpu_custom_call.1} parent=1 // pred_fallthru
      _
    // Predicated region
    $region6: #{tpu_custom_call.1} parent=1 // pred_check
      _
    $region7: #{tpu_custom_call.1} parent=1 // pred_check_branch
      %26 = sbr.rel (0) target = $region9
    $region8: #{tpu_custom_call.1} parent=1 // pred_region
      %s28 = ssub.s32 2048, 2048
      %29 = vsyncadd [#allocation6], %s28
      %s30 = sshll.u32 [#allocation5], 4
      %s31 = int_to_ptr.vmem [resolvable:$true] %s30
      %36 = dma.hbm_to_vmem [thread:$0]  %s1, 2048, %s31, [#allocation6], 128, 128, 8
    $region9: #{tpu_custom_call.1} parent=1 // pred_fallthru
      _
    // Predicated region
    $region10: #{tpu_custom_call.1} parent=1 // pred_check
      _
    $region11: #{tpu_custom_call.1} parent=1 // pred_check_branch
      %38 = sbr.rel (0) target = $region13
    $region12: #{tpu_custom_call.1} parent=1 // pred_region
      _
    $region13: #{tpu_custom_call.1} parent=1 // pred_fallthru
      _
    // Predicated region
    $region14: #{tpu_custom_call.1} parent=1 // pred_check
      _
    $region15: #{tpu_custom_call.1} parent=1 // pred_check_branch
      %40 = sbr.rel (0) target = $region17
    $region16: #{tpu_custom_call.1} parent=1 // pred_region
      %s42 = ssub.s32 2048, 2048
      %43 = vsyncadd [#allocation6], %s42
      %s44 = sshll.u32 [#allocation7], 4
      %s45 = int_to_ptr.vmem [resolvable:$true] %s44
      %50 = dma.hbm_to_vmem [thread:$0]  %s3, 2048, %s45, [#allocation6], 128, 128, 8
    $region17: #{tpu_custom_call.1} parent=1 // pred_fallthru
      _
    // Predicated region
    $region18: #{tpu_custom_call.1} parent=1 // pred_check
      _
    $region19: #{tpu_custom_call.1} parent=1 // pred_check_branch
      %52 = sbr.rel (0) target = $region21
    $region20: #{tpu_custom_call.1} parent=1 // pred_region
      _
    $region21: #{tpu_custom_call.1} parent=1 // pred_fallthru
      _
    // Predicated region
    $region22: #{tpu_custom_call.1} parent=1 // pred_check
      _
    $region23: #{tpu_custom_call.1} parent=1 // pred_check_branch
      %54 = sbr.rel (0) target = $region25
    $region24: #{tpu_custom_call.1} parent=1 // pred_region
      %55 = dma.done [#allocation3], 256
    $region25: #{tpu_custom_call.1} parent=1 // pred_fallthru
      _
    // Predicated region
    $region26: #{tpu_custom_call.1} parent=1 // pred_check
      _
    $region27: #{tpu_custom_call.1} parent=1 // pred_check_branch
      %57 = sbr.rel (0) target = $region29
    $region28: #{tpu_custom_call.1} parent=1 // pred_region
      %58 = dma.done [#allocation6], 2048
    $region29: #{tpu_custom_call.1} parent=1 // pred_fallthru
      _
    // Predicated region
    $region30: #{tpu_custom_call.1} parent=1 // pred_check
      _
    $region31: #{tpu_custom_call.1} parent=1 // pred_check_branch
      %60 = sbr.rel (0) target = $region33
    $region32: #{tpu_custom_call.1} parent=1 // pred_region
      %61 = dma.done [#allocation6], 2048
    $region33: #{tpu_custom_call.1} parent=1 // pred_fallthru
      _
    %v62 = vld [vmem:[#allocation2] sm:$0xff]
    %v63 = vld [vmem:[#allocation2 + $0x8] sm:$0xff]
    %v64 = vld [vmem:[#allocation5] sm:$0xff]
    %v65 = vld [vmem:[#allocation5 + $0x8] sm:$0xff]
    %v66 = vld [vmem:[#allocation5 + $0x10] sm:$0xff]
    %v67 = vld [vmem:[#allocation5 + $0x18] sm:$0xff]
    %v68 = vld [vmem:[#allocation5 + $0x20] sm:$0xff]
    %v69 = vld [vmem:[#allocation5 + $0x28] sm:$0xff]
    %v70 = vld [vmem:[#allocation5 + $0x30] sm:$0xff]
    %v71 = vld [vmem:[#allocation5 + $0x38] sm:$0xff]
    %v72 = vld [vmem:[#allocation5 + $0x40] sm:$0xff]
    %v73 = vld [vmem:[#allocation5 + $0x48] sm:$0xff]
    %v74 = vld [vmem:[#allocation5 + $0x50] sm:$0xff]
    %v75 = vld [vmem:[#allocation5 + $0x58] sm:$0xff]
    %v76 = vld [vmem:[#allocation5 + $0x60] sm:$0xff]
    %v77 = vld [vmem:[#allocation5 + $0x68] sm:$0xff]
    %v78 = vld [vmem:[#allocation5 + $0x70] sm:$0xff]
    %v79 = vld [vmem:[#allocation5 + $0x78] sm:$0xff]
    %v80 = vld [vmem:[%s2] sm:$0x1]
    %v82 = vlaneseq
    %v83 = vshrl.u32 %v82, 7
    %v84 = vsub.s32 0, %v83
    %v85 = vrot.slane %v80, %v84
    %87 = vmatprep.subr.mxu0 0.0
    %88 = vmatpush1.msra.mxu0 %v64
    %89 = vmatprep.subr.mxu0 0.0
    %90 = vmatpush1.msra.mxu0 %v65
    %91 = vmatprep.subr.mxu0 0.0
    %92 = vmatpush1.msra.mxu0 %v66
    %93 = vmatprep.subr.mxu0 0.0
    %94 = vmatpush1.msra.mxu0 %v67
    %95 = vmatprep.subr.mxu0 0.0
    %96 = vmatpush1.msra.mxu0 %v68
    %97 = vmatprep.subr.mxu0 0.0
    %98 = vmatpush1.msra.mxu0 %v69
    %99 = vmatprep.subr.mxu0 0.0
    %100 = vmatpush1.msra.mxu0 %v70
    %101 = vmatprep.subr.mxu0 0.0
    %102 = vmatpush1.msra.mxu0 %v71
    %103 = vmatprep.subr.mxu0 0.0
    %104 = vmatpush1.msra.mxu0 %v72
    %105 = vmatprep.subr.mxu0 0.0
    %106 = vmatpush1.msra.mxu0 %v73
    %107 = vmatprep.subr.mxu0 0.0
    %108 = vmatpush1.msra.mxu0 %v74
    %109 = vmatprep.subr.mxu0 0.0
    %110 = vmatpush1.msra.mxu0 %v75
    %111 = vmatprep.subr.mxu0 0.0
    %112 = vmatpush1.msra.mxu0 %v76
    %113 = vmatprep.subr.mxu0 0.0
    %114 = vmatpush1.msra.mxu0 %v77
    %115 = vmatprep.subr.mxu0 0.0
    %116 = vmatpush1.msra.mxu0 %v78
    %117 = vmatprep.subr.mxu0 0.0
    %118 = vmatpush1.msra.mxu0 %v79
    %119 = vmatprep.subr.mxu0 0.0
    %120 = vmatpush1.msra.mxu0 0.0
    %121 = vmatprep.subr.mxu0 0.0
    %122 = vmatpush1.msra.mxu0 0.0
    %123 = vmatprep.subr.mxu0 0.0
    %124 = vmatpush1.msra.mxu0 0.0
    %125 = vmatprep.subr.mxu0 0.0
    %126 = vmatpush1.msra.mxu0 0.0
    %127 = vmatprep.subr.mxu0 0.0
    %128 = vmatpush1.msra.mxu0 0.0
    %129 = vmatprep.subr.mxu0 0.0
    %130 = vmatpush1.msra.mxu0 0.0
    %131 = vmatprep.subr.mxu0 0.0
    %132 = vmatpush1.msra.mxu0 0.0
    %133 = vmatprep.subr.mxu0 0.0
    %134 = vmatpush1.msra.mxu0 0.0
    %135 = vmatprep.subr.mxu0 0.0
    %136 = vmatpush1.msra.mxu0 0.0
    %137 = vmatprep.subr.mxu0 0.0
    %138 = vmatpush1.msra.mxu0 0.0
    %139 = vmatprep.subr.mxu0 0.0
    %140 = vmatpush1.msra.mxu0 0.0
    %141 = vmatprep.subr.mxu0 0.0
    %142 = vmatpush1.msra.mxu0 0.0
    %143 = vmatprep.subr.mxu0 0.0
    %144 = vmatpush1.msra.mxu0 0.0
    %145 = vmatprep.subr.mxu0 0.0
    %146 = vmatpush1.msra.mxu0 0.0
    %147 = vmatprep.subr.mxu0 0.0
    %148 = vmatpush1.msra.mxu0 0.0
    %149 = vmatprep.subr.mxu0 0.0
    %150 = vmatpush1.msra.mxu0 0.0
    %151 = vmatprep.mubr.f32.mxu0 0.0
    %152 = vmatmul.mubr.f32.gmra.mrb[0].mxu0 %v62
    %v153 = vpop.f32.mrb[0].mxu0
    %v154 = vadd.f32 %v85, %v153
    %v155 = vpop.f32.mrb[0].mxu0
    %156 = vmatprep.mubr.f32.mxu0 0.0
    %157 = vmatmul.mubr.f32.gmra.mrb[0].mxu0 %v63
    %v158 = vpop.f32.mrb[0].mxu0
    %v159 = vadd.f32 %v85, %v158
    %v160 = vpop.f32.mrb[0].mxu0
    %161 = vdwg.mxu0
    %v162 = vld [vmem:[#allocation7] sm:$0xff]
    %v163 = vld [vmem:[#allocation7 + $0x8] sm:$0xff]
    %v164 = vld [vmem:[#allocation7 + $0x10] sm:$0xff]
    %v165 = vld [vmem:[#allocation7 + $0x18] sm:$0xff]
    %v166 = vld [vmem:[#allocation7 + $0x20] sm:$0xff]
    %v167 = vld [vmem:[#allocation7 + $0x28] sm:$0xff]
    %v168 = vld [vmem:[#allocation7 + $0x30] sm:$0xff]
    %v169 = vld [vmem:[#allocation7 + $0x38] sm:$0xff]
    %v170 = vld [vmem:[#allocation7 + $0x40] sm:$0xff]
    %v171 = vld [vmem:[#allocation7 + $0x48] sm:$0xff]
    %v172 = vld [vmem:[#allocation7 + $0x50] sm:$0xff]
    %v173 = vld [vmem:[#allocation7 + $0x58] sm:$0xff]
    %v174 = vld [vmem:[#allocation7 + $0x60] sm:$0xff]
    %v175 = vld [vmem:[#allocation7 + $0x68] sm:$0xff]
    %v176 = vld [vmem:[#allocation7 + $0x70] sm:$0xff]
    %v177 = vld [vmem:[#allocation7 + $0x78] sm:$0xff]
    %v178 = vld [vmem:[%s4] sm:$0x1]
    %v180 = vlaneseq
    %v181 = vshrl.u32 %v180, 7
    %v182 = vsub.s32 0, %v181
    %v183 = vrot.slane %v178, %v182
    %185 = vmatprep.subr.mxu0 0.0
    %186 = vmatpush1.msra.mxu0 %v162
    %187 = vmatprep.subr.mxu0 0.0
    %188 = vmatpush1.msra.mxu0 %v163
    %189 = vmatprep.subr.mxu0 0.0
    %190 = vmatpush1.msra.mxu0 %v164
    %191 = vmatprep.subr.mxu0 0.0
    %192 = vmatpush1.msra.mxu0 %v165
    %193 = vmatprep.subr.mxu0 0.0
    %194 = vmatpush1.msra.mxu0 %v166
    %195 = vmatprep.subr.mxu0 0.0
    %196 = vmatpush1.msra.mxu0 %v167
    %197 = vmatprep.subr.mxu0 0.0
    %198 = vmatpush1.msra.mxu0 %v168
    %199 = vmatprep.subr.mxu0 0.0
    %200 = vmatpush1.msra.mxu0 %v169
    %201 = vmatprep.subr.mxu0 0.0
    %202 = vmatpush1.msra.mxu0 %v170
    %203 = vmatprep.subr.mxu0 0.0
    %204 = vmatpush1.msra.mxu0 %v171
    %205 = vmatprep.subr.mxu0 0.0
    %206 = vmatpush1.msra.mxu0 %v172
    %207 = vmatprep.subr.mxu0 0.0
    %208 = vmatpush1.msra.mxu0 %v173
    %209 = vmatprep.subr.mxu0 0.0
    %210 = vmatpush1.msra.mxu0 %v174
    %211 = vmatprep.subr.mxu0 0.0
    %212 = vmatpush1.msra.mxu0 %v175
    %213 = vmatprep.subr.mxu0 0.0
    %214 = vmatpush1.msra.mxu0 %v176
    %215 = vmatprep.subr.mxu0 0.0
    %216 = vmatpush1.msra.mxu0 %v177
    %217 = vmatprep.subr.mxu0 0.0
    %218 = vmatpush1.msra.mxu0 0.0
    %219 = vmatprep.subr.mxu0 0.0
    %220 = vmatpush1.msra.mxu0 0.0
    %221 = vmatprep.subr.mxu0 0.0
    %222 = vmatpush1.msra.mxu0 0.0
    %223 = vmatprep.subr.mxu0 0.0
    %224 = vmatpush1.msra.mxu0 0.0
    %225 = vmatprep.subr.mxu0 0.0
    %226 = vmatpush1.msra.mxu0 0.0
    %227 = vmatprep.subr.mxu0 0.0
    %228 = vmatpush1.msra.mxu0 0.0
    %229 = vmatprep.subr.mxu0 0.0
    %230 = vmatpush1.msra.mxu0 0.0
    %231 = vmatprep.subr.mxu0 0.0
    %232 = vmatpush1.msra.mxu0 0.0
    %233 = vmatprep.subr.mxu0 0.0
    %234 = vmatpush1.msra.mxu0 0.0
    %235 = vmatprep.subr.mxu0 0.0
    %236 = vmatpush1.msra.mxu0 0.0
    %237 = vmatprep.subr.mxu0 0.0
    %238 = vmatpush1.msra.mxu0 0.0
    %239 = vmatprep.subr.mxu0 0.0
    %240 = vmatpush1.msra.mxu0 0.0
    %241 = vmatprep.subr.mxu0 0.0
    %242 = vmatpush1.msra.mxu0 0.0
    %243 = vmatprep.subr.mxu0 0.0
    %244 = vmatpush1.msra.mxu0 0.0
    %245 = vmatprep.subr.mxu0 0.0
    %246 = vmatpush1.msra.mxu0 0.0
    %247 = vmatprep.subr.mxu0 0.0
    %248 = vmatpush1.msra.mxu0 0.0
    %249 = vmatprep.mubr.f32.mxu0 0.0
    %250 = vmatmul.mubr.f32.gmra.mrb[0].mxu0 %v154
    %v251 = vpop.f32.mrb[0].mxu0
    %v252 = vadd.f32 %v183, %v251
    %v253 = vpop.f32.mrb[0].mxu0
    %254 = vmatprep.mubr.f32.mxu0 0.0
    %255 = vmatmul.mubr.f32.gmra.mrb[0].mxu0 %v159
    %v256 = vpop.f32.mrb[0].mxu0
    %v257 = vadd.f32 %v183, %v256
    %v258 = vpop.f32.mrb[0].mxu0
    %259 = vdwg.mxu0
    %260 = vst [vmem:[#allocation8] sm:$0xff] %v252
    %261 = vst [vmem:[#allocation8 + $0x8] sm:$0xff] %v257
    // Predicated region
    $region34: #{tpu_custom_call.1} parent=1 // pred_check
      _
    $region35: #{tpu_custom_call.1} parent=1 // pred_check_branch
      %263 = sbr.rel (0) target = $region37
    $region36: #{tpu_custom_call.1} parent=1 // pred_region
      %s265 = ssub.s32 256, 256
      %266 = vsyncadd [#allocation4], %s265
      %s267 = sshll.u32 [#allocation8], 4
      %s268 = int_to_ptr.vmem [resolvable:$true] %s267
      %273 = dma.vmem_to_hbm [thread:$0]  %s268, 256, %s5, [#allocation4], 128, 128, 8
    $region37: #{tpu_custom_call.1} parent=1 // pred_fallthru
      _
    // Predicated region
    $region38: #{tpu_custom_call.1} parent=1 // pred_check
      _
    $region39: #{tpu_custom_call.1} parent=1 // pred_check_branch
      %275 = sbr.rel (0) target = $region41
    $region40: #{tpu_custom_call.1} parent=1 // pred_region
      %276 = dma.done [#allocation4], 256
    $region41: #{tpu_custom_call.1} parent=1 // pred_fallthru
      _
    %277 = vsyncpa [#allocation3], 1
    %278 = vsyncpa [#allocation6], 1
    %279 = vsyncpa [#allocation4], 1

</llo_original>
